<compile_context>
chip_gen: v7x
topology: tpu7x:2x2x1
jax: 0.10.0
libtpu: 0.0.40
codegen_flags: <defaults>
</compile_context>

<pallas_src>
import functools

import jax
import jax.numpy as jnp
from jax.experimental import pallas as pl
from jax.experimental.pallas import tpu as pltpu

LANES = 128      # vreg lane width; last dim of every tile
SUBLANES = 8     # f32 sublane count; accumulator height


def _alpha_loss_kernel(a_ref, b_ref, out_ref, *, epsilon):
    """Robust-L1 term, folded to an (8, 128) running accumulator in out_ref."""
    i = pl.program_id(0)

    @pl.when(i == 0)
    def _():
        out_ref[...] = jnp.zeros_like(out_ref)

    a = a_ref[...].astype(jnp.float32)
    b = b_ref[...].astype(jnp.float32)
    diff = a - b
    eps2 = jnp.float32(epsilon * epsilon)  # matches PyTorch: python-double eps**2 -> f32
    term = jnp.sqrt(diff * diff + eps2)

    # Fold (tile_rows, 128) -> (8, 128) with plain VALU adds (no XLU in the
    # steady-state loop); the final cross-sublane/lane reduce happens once in
    # the wrapper.
    tm, tn = term.shape
    out_ref[...] += jnp.sum(term.reshape(tm // SUBLANES, SUBLANES, tn), axis=0)


def alpha_prediction_loss(alpha_pred, alpha_true, epsilon=1e-6, tile_rows=1024):
    """Pallas implementation of AlphaPredictionLoss.forward (returns scalar f32)."""
    assert alpha_pred.shape == alpha_true.shape
    n = int(alpha_pred.size)

    # Flatten (free metadata reshape for contiguous NCHW inputs); keep native
    # dtype — the f32 cast happens inside the kernel.
    p = alpha_pred.reshape(-1)
    t = alpha_true.reshape(-1)

    # Pick the tile: multiple of 8 sublanes, no bigger than the (rounded-up)
    # row count so tiny inputs don't get over-padded.
    tile_rows = max(SUBLANES, (int(tile_rows) // SUBLANES) * SUBLANES)
    rows = pl.cdiv(n, LANES)
    tile_rows = min(tile_rows, pl.cdiv(rows, SUBLANES) * SUBLANES)

    rows_padded = pl.cdiv(rows, tile_rows) * tile_rows
    total = rows_padded * LANES
    pad = total - n

    # Pad only when the flat size is not already tile-aligned.
    if pad:
        p = jnp.pad(p, (0, pad))
        t = jnp.pad(t, (0, pad))
    p = p.reshape(rows_padded, LANES)
    t = t.reshape(rows_padded, LANES)

    grid = (rows_padded // tile_rows,)
    kernel = functools.partial(_alpha_loss_kernel, epsilon=float(epsilon))

    # TODO(synk): on v7x, add a leading size-2 "parallel" grid axis (one output
    # slot per TensorCore) to use both cores; single-core is optimal on v5e/v6e.
    partial_sums = pl.pallas_call(
        kernel,
        out_shape=jax.ShapeDtypeStruct((SUBLANES, LANES), jnp.float32),
        grid_spec=pltpu.PrefetchScalarGridSpec(
            num_scalar_prefetch=0,
            grid=grid,
            in_specs=[
                pl.BlockSpec((tile_rows, LANES), lambda i: (i, 0)),
                pl.BlockSpec((tile_rows, LANES), lambda i: (i, 0)),
            ],
            out_specs=pl.BlockSpec((SUBLANES, LANES), lambda i: (0, 0)),
        ),
        compiler_params=pltpu.CompilerParams(
            dimension_semantics=("arbitrary",),  # reduction axis
        ),
    )(p, t)

    loss = jnp.sum(partial_sums)

    # Each padded element has diff == 0 and contributed exactly sqrt(f32(eps^2));
    # subtract that exact amount (f32 rounding here is ~pad*1e-6*ulp — negligible).
    if pad:
        pad_term = jnp.sqrt(jnp.float32(epsilon * epsilon))
        loss = loss - jnp.float32(pad) * pad_term

    return loss


if __name__ == "__main__":
    key = jax.random.PRNGKey(0)
    k1, k2 = jax.random.split(key)

    # NCHW alpha maps (batch=2, channels=1, spatial=16), as the module implies.
    alpha_pred = jax.random.uniform(k1, (2, 1, 16, 16), dtype=jnp.float32)
    alpha_true = jax.random.uniform(k2, (2, 1, 16, 16), dtype=jnp.float32)

    loss = alpha_prediction_loss(alpha_pred, alpha_true, epsilon=1e-6)
    loss = jax.block_until_ready(loss)

    # Reference check (pure JAX, same math as the PyTorch forward).
    ref = jnp.sum(jnp.sqrt((alpha_pred - alpha_true) ** 2 + jnp.float32(1e-6) ** 2))
    assert jnp.allclose(loss, ref, rtol=1e-5, atol=1e-5), (loss, ref)

    print("KERNEL_OK")
</pallas_src>

<mosaic_0001>
module attributes {stable_mosaic.version = 11 : i64} {
  func.func @_alpha_loss_kernel(%arg0: i32, %arg1: memref<8x128xf32, #tpu.memory_space<vmem>>, %arg2: memref<8x128xf32, #tpu.memory_space<vmem>>, %arg3: memref<8x128xf32, #tpu.memory_space<vmem>>) attributes {dimension_semantics = [#tpu.dimension_semantics<arbitrary>], iteration_bounds = array<i64: 1>, scalar_prefetch = 0 : i64, scratch_operands = 0 : i64, tpu.core_type = #tpu.core_type<tc>, window_params = [{transform_indices = @transform_0, window_bounds = array<i64: 8, 128>}, {transform_indices = @transform_1, window_bounds = array<i64: 8, 128>}, {pipeline_mode = #tpu.pipeline_mode<synchronous>, transform_indices = @transform_2, window_bounds = array<i64: 8, 128>}]} {
    %c0_i32 = arith.constant 0 : i32
    %0 = arith.cmpi eq, %arg0, %c0_i32 : i32
    %1 = arith.extui %0 : i1 to i32
    %c0_i32_0 = arith.constant 0 : i32
    %2 = arith.cmpi ne, %1, %c0_i32_0 : i32
    scf.if %2 {
      %cst_9 = arith.constant 0.000000e+00 : f32
      %15 = vector.broadcast %cst_9 : f32 to vector<8x128xf32>
      %c0_10 = arith.constant 0 : index
      %c0_11 = arith.constant 0 : index
      %16 = vector.load %arg3[%c0_10, %c0_11] : memref<8x128xf32, #tpu.memory_space<vmem>>, vector<8x128xf32>
      tpu.vector_store %arg3[%c0_10, %c0_11], %15 {strides = array<i32>} : memref<8x128xf32, #tpu.memory_space<vmem>>, vector<8x128xf32>,
    } else {
    }
    %c0 = arith.constant 0 : index
    %c0_1 = arith.constant 0 : index
    %3 = vector.load %arg1[%c0, %c0_1] : memref<8x128xf32, #tpu.memory_space<vmem>>, vector<8x128xf32>
    %c0_2 = arith.constant 0 : index
    %c0_3 = arith.constant 0 : index
    %4 = vector.load %arg2[%c0_2, %c0_3] : memref<8x128xf32, #tpu.memory_space<vmem>>, vector<8x128xf32>
    %5 = arith.subf %3, %4 : vector<8x128xf32>
    %6 = arith.mulf %5, %5 : vector<8x128xf32>
    %cst = arith.constant 9.99999996E-13 : f32
    %7 = vector.broadcast %cst : f32 to vector<8x128xf32>
    %8 = arith.addf %6, %7 : vector<8x128xf32>
    %9 = math.sqrt %8 : vector<8x128xf32>
    %c0_4 = arith.constant 0 : index
    %c0_5 = arith.constant 0 : index
    %10 = vector.load %arg3[%c0_4, %c0_5] : memref<8x128xf32, #tpu.memory_space<vmem>>, vector<8x128xf32>
    %11 = vector.shape_cast %9 : vector<8x128xf32> to vector<1x8x128xf32>
    %cst_6 = arith.constant dense<0.000000e+00> : vector<8x128xf32>
    %12 = vector.multi_reduction <add>, %11, %cst_6 [0] : vector<1x8x128xf32> to vector<8x128xf32>
    %13 = arith.addf %10, %12 : vector<8x128xf32>
    %c0_7 = arith.constant 0 : index
    %c0_8 = arith.constant 0 : index
    %14 = vector.load %arg3[%c0_7, %c0_8] : memref<8x128xf32, #tpu.memory_space<vmem>>, vector<8x128xf32>
    tpu.vector_store %arg3[%c0_7, %c0_8], %13 {strides = array<i32>} : memref<8x128xf32, #tpu.memory_space<vmem>>, vector<8x128xf32>,
    return
  }
  func.func @transform_0(%arg0: i32) -> (i32, i32) {
    %c0_i32 = arith.constant 0 : i32
    %c0_i32_0 = arith.constant 0 : i32
    return %arg0, %c0_i32 : i32, i32
  }
  func.func @transform_1(%arg0: i32) -> (i32, i32) {
    %c0_i32 = arith.constant 0 : i32
    %c0_i32_0 = arith.constant 0 : i32
    return %arg0, %c0_i32 : i32, i32
  }
  func.func @transform_2(%arg0: i32) -> (i32, i32) {
    %c0_i32 = arith.constant 0 : i32
    %c0_i32_0 = arith.constant 0 : i32
    %c0_i32_1 = arith.constant 0 : i32
    return %c0_i32, %c0_i32_0 : i32, i32
  }
}

</mosaic_0001>

<llo_original>
// kernel: tpu_custom_call.1
$region0: #{tpu_custom_call.1}
  #allocation0 [shape = 'u32[]', space=smem, size = 0x4, offset = 0x4, fixed_abs, tag = 'smem constant byte address 0x4 - core index']
  #allocation1 [shape = 'u32[144,128]{1,0:T(1,128)}', space=vmem, size = 0x12000, scoped, tag = 'internal scratch']
  %s0 = inlined_call_operand.hbm [shape: f32[8,128], index: 0, kind: input, shape index: {}]
  %s1 = inlined_call_operand.hbm [shape: f32[8,128], index: 1, kind: input, shape index: {}]
  %s2 = inlined_call_operand.hbm [shape: f32[8,128], index: 2, kind: output, shape index: {}]
  %s3 = sld [smem:[#allocation0]]
  $region30: #{tpu_custom_call.1} parent=0
    _
  %s5 = ssub.s32 1, %s3
  %s6 = scalar_select 0, %s5, %s3
  $region1: #{tpu_custom_call.1} parent=0
    #allocation2 [shape = 'u8[4096]{0}', space=vmem, size = 0x1000, scoped, tag = 'input window, operand 0, single buffered']
    #allocation3 [shape = 's32[1]{0}', space=sflag, size = 0x4, scoped, tag = 'scoped memory for tpu_custom_call.1']
    #allocation4 [shape = 's32[1]{0}', space=sflag, size = 0x4, scoped, tag = 'scoped memory for tpu_custom_call.1']
    #allocation5 [shape = 'u8[4096]{0}', space=vmem, size = 0x1000, scoped, tag = 'input window, operand 1, single buffered']
    #allocation6 [shape = 's32[1]{0}', space=sflag, size = 0x4, scoped, tag = 'scoped memory for tpu_custom_call.1']
    #allocation7 [shape = 'u8[4096]{0}', space=vmem, size = 0x1000, scoped, tag = 'output window, operand 0, single buffered']
    %7 = vsyncpa [#allocation3], 0
    %8 = vsyncpa [#allocation6], 0
    %9 = vsyncpa [#allocation4], 0
    // Predicated region
    $region2: #{tpu_custom_call.1} parent=1 // pred_check
      _
    $region3: #{tpu_custom_call.1} parent=1 // pred_check_branch
      %11 = sbr.rel (0) target = $region5
    $region4: #{tpu_custom_call.1} parent=1 // pred_region
      %s13 = ssub.s32 128, 128
      %14 = vsyncadd [#allocation3], %s13
      %s16 = sshll.u32 [#allocation2], 4
      %s17 = int_to_ptr.vmem [resolvable:$true] %s16
      %19 = dma.hbm_to_vmem [thread:$0]  %s0, 128, %s17, [#allocation3]
    $region5: #{tpu_custom_call.1} parent=1 // pred_fallthru
      _
    // Predicated region
    $region6: #{tpu_custom_call.1} parent=1 // pred_check
      _
    $region7: #{tpu_custom_call.1} parent=1 // pred_check_branch
      %21 = sbr.rel (0) target = $region9
    $region8: #{tpu_custom_call.1} parent=1 // pred_region
      %s23 = ssub.s32 128, 128
      %24 = vsyncadd [#allocation6], %s23
      %s26 = sshll.u32 [#allocation5], 4
      %s27 = int_to_ptr.vmem [resolvable:$true] %s26
      %29 = dma.hbm_to_vmem [thread:$0]  %s1, 128, %s27, [#allocation6]
    $region9: #{tpu_custom_call.1} parent=1 // pred_fallthru
      _
    // Predicated region
    $region10: #{tpu_custom_call.1} parent=1 // pred_check
      _
    $region11: #{tpu_custom_call.1} parent=1 // pred_check_branch
      %31 = sbr.rel (0) target = $region13
    $region12: #{tpu_custom_call.1} parent=1 // pred_region
      %32 = dma.done [#allocation3], 128
    $region13: #{tpu_custom_call.1} parent=1 // pred_fallthru
      _
    // Predicated region
    $region14: #{tpu_custom_call.1} parent=1 // pred_check
      _
    $region15: #{tpu_custom_call.1} parent=1 // pred_check_branch
      %34 = sbr.rel (0) target = $region17
    $region16: #{tpu_custom_call.1} parent=1 // pred_region
      %35 = dma.done [#allocation6], 128
    $region17: #{tpu_custom_call.1} parent=1 // pred_fallthru
      _
    %p36 = scmp.eq.s32.totalorder 0, 0
    // Predicated region
    $region18: #{tpu_custom_call.1} parent=1 // pred_check
      %p37 = pneg %p36
    $region19: #{tpu_custom_call.1} parent=1 // pred_check_branch
      %39 = sbr.rel (%p37) target = $region21
    $region20: #{tpu_custom_call.1} parent=1 // pred_region
      %40 = vst [vmem:[#allocation7] sm:$0xff] 0.0
    $region21: #{tpu_custom_call.1} parent=1 // pred_fallthru
      _
    %v41 = vld [vmem:[#allocation2] sm:$0xff]
    %v42 = vld [vmem:[#allocation5] sm:$0xff]
    %v43 = vsub.f32 %v41, %v42
    %v44 = vmul.f32 %v43, %v43
    %v45 = vadd.f32 %v44, 1e-12
    %v46 = vrsqrt.pop %v45
    %v47 = vmul.f32 %v45, %v46
    %vm48 = vcmp.eq.f32.partialorder %v45, inf
    %v49 = vsel %vm48, %v45, %v47
    %vm50 = vcmp.eq.f32.partialorder %v45, 0.0
    %v51 = vand.u32 %v45, 2147483648
    %v52 = vsel %vm50, %v51, %v49
    %v53 = vld [vmem:[#allocation7] sm:$0xff]
    %v54 = vadd.f32 %v52, 0.0
    %v55 = vadd.f32 %v53, %v54
    %56 = vst [vmem:[#allocation7] sm:$0xff] %v55
    // Predicated region
    $region22: #{tpu_custom_call.1} parent=1 // pred_check
      _
    $region23: #{tpu_custom_call.1} parent=1 // pred_check_branch
      %58 = sbr.rel (0) target = $region25
    $region24: #{tpu_custom_call.1} parent=1 // pred_region
      %s60 = ssub.s32 128, 128
      %61 = vsyncadd [#allocation4], %s60
      %s63 = sshll.u32 [#allocation7], 4
      %s64 = int_to_ptr.vmem [resolvable:$true] %s63
      %66 = dma.vmem_to_hbm [thread:$0]  %s64, 128, %s2, [#allocation4]
    $region25: #{tpu_custom_call.1} parent=1 // pred_fallthru
      _
    // Predicated region
    $region26: #{tpu_custom_call.1} parent=1 // pred_check
      _
    $region27: #{tpu_custom_call.1} parent=1 // pred_check_branch
      %68 = sbr.rel (0) target = $region29
    $region28: #{tpu_custom_call.1} parent=1 // pred_region
      %69 = dma.done [#allocation4], 128
    $region29: #{tpu_custom_call.1} parent=1 // pred_fallthru
      _
    %70 = vsyncpa [#allocation3], 1
    %71 = vsyncpa [#allocation6], 1
    %72 = vsyncpa [#allocation4], 1

</llo_original>
